<compile_context>
chip_gen: v6e
topology: v6e:2x2x1
jax: 0.10.0
libtpu: 0.0.40
codegen_flags: <defaults>
</compile_context>

<pallas_src>
import functools

import jax
import jax.numpy as jnp
from jax.experimental import pallas as pl
from jax.experimental.pallas import tpu as pltpu


_BN_EPS = 1e-5


# ---------------------------------------------------------------------------
# Pallas kernel: the whole FeatureProc applied to one pixel tile
# ---------------------------------------------------------------------------
def _feature_proc_kernel(n_layers, x_ref, *refs):
    """Fused FeatureProc on one (channels, tile_p) pixel tile.

    Per Block (BN pre-folded into weights, conv2/residual merged):
        h   = relu(W1' @ x + b1')
        out = relu([Wr' | W2'] @ [x; h] + (br' + b2'))
    """
    o_ref = refs[-1]
    x = x_ref[...]                                  # (cin_pad, tile_p) f32
    for layer in range(n_layers):                   # static unroll
        w1_ref, b1_ref, wm_ref, bm_ref = refs[4 * layer: 4 * layer + 4]
        h = jnp.maximum(
            jnp.dot(w1_ref[...], x, preferred_element_type=jnp.float32)
            + b1_ref[...], 0.0)
        xh = jnp.concatenate([x, h], axis=0)        # sublane-aligned (both %8)
        x = jnp.maximum(
            jnp.dot(wm_ref[...], xh, preferred_element_type=jnp.float32)
            + bm_ref[...], 0.0)
    o_ref[...] = x.astype(o_ref.dtype)


# ---------------------------------------------------------------------------
# Host-side parameter prep: fold BN, merge branches, pad channels
# ---------------------------------------------------------------------------
def _round_up(n, m):
    return ((n + m - 1) // m) * m


def _fold_bn(gamma, beta, running_mean, running_var):
    scale = gamma / jnp.sqrt(running_var + _BN_EPS)
    bias = beta - running_mean * scale
    return scale, bias


def prepare_params(raw_params, in_channels):
    """Fold eval-mode BN into conv weights, merge conv2 + residual branches,
    and zero-pad all channel counts to multiples of 8 (sublane alignment).

    Returns (prepped, out_channels) with out_channels = true final channels.
    """
    prepped = []
    cin, cin_pad = in_channels, _round_up(in_channels, 8)
    cout = in_channels
    for p in raw_params:
        cout = p["w1"].shape[0]
        cout_pad = _round_up(cout, 8)
        s1, b1 = _fold_bn(*p["bn1"])
        s2, b2 = _fold_bn(*p["bn2"])
        sr, br = _fold_bn(*p["bnr"])
        # Fold per-output-channel BN scale into the 1x1 conv weights.
        w1 = p["w1"] * s1[:, None]                     # (cout, cin)
        w2 = p["w2"] * s2[:, None]                     # (cout, cout)
        wr = p["wr"] * sr[:, None]                     # (cout, cin)
        # Zero-pad: extra input channels are zero, extra output channels come
        # out as relu(0 + 0) = 0 and hit zero weight columns downstream.
        w1p = jnp.pad(w1, ((0, cout_pad - cout), (0, cin_pad - cin)))
        wrp = jnp.pad(wr, ((0, cout_pad - cout), (0, cin_pad - cin)))
        w2p = jnp.pad(w2, ((0, cout_pad - cout), (0, cout_pad - cout)))
        prepped.append({
            "w1": w1p,
            "b1": jnp.pad(b1, (0, cout_pad - cout))[:, None],
            "wm": jnp.concatenate([wrp, w2p], axis=1),   # [Wr' | W2']
            "bm": jnp.pad(b2 + br, (0, cout_pad - cout))[:, None],
        })
        cin, cin_pad = cout, cout_pad
    return prepped, cout


# ---------------------------------------------------------------------------
# Synthetic, deterministic "PyTorch-like" raw parameters
# ---------------------------------------------------------------------------
def _make_block_raw(key, cin, cout):
    ks = jax.random.split(key, 6)

    def conv_w(k, ci, co):
        bound = 1.0 / jnp.sqrt(ci)                      # Conv2d default-ish init
        return jax.random.uniform(k, (co, ci), jnp.float32, -bound, bound)

    def bn(k, c):
        k1, k2, k3, k4 = jax.random.split(k, 4)
        gamma = 1.0 + 0.1 * jax.random.normal(k1, (c,), jnp.float32)
        beta = 0.1 * jax.random.normal(k2, (c,), jnp.float32)
        rmean = 0.1 * jax.random.normal(k3, (c,), jnp.float32)
        rvar = 1.0 + 0.1 * jax.random.uniform(k4, (c,), jnp.float32)
        return gamma, beta, rmean, rvar

    return {
        "w1": conv_w(ks[0], cin, cout), "bn1": bn(ks[3], cout),
        "w2": conv_w(ks[1], cout, cout), "bn2": bn(ks[4], cout),
        "wr": conv_w(ks[2], cin, cout), "bnr": bn(ks[5], cout),
    }


def make_feature_proc_params(key, in_channels, layer_mults):
    keys = jax.random.split(key, len(layer_mults))
    raw, cin = [], in_channels
    for i, m in enumerate(layer_mults):
        cout = in_channels * m
        raw.append(_make_block_raw(keys[i], cin, cout))
        cin = cout
    return raw


# ---------------------------------------------------------------------------
# Forward pass
# ---------------------------------------------------------------------------
def _choose_tile_p(P, max_tile=2048):
    """Lane-dim pixel tile: multiple of 128, capped for VMEM (v7x: 64 MiB),
    and split so the grid has >= 2 steps when possible (v7x has 2 TCs)."""
    Pp = _round_up(P, 128)
    tile = min(max_tile, Pp)
    if Pp // tile < 2 and Pp >= 256:
        tile = max(128, (Pp // 2) // 128 * 128)
    return tile


@functools.partial(jax.jit, static_argnums=(2,))
def feature_proc_forward(x_nchw, prepped, out_channels):
    N, C, H, W = x_nchw.shape
    P = N * H * W
    n_layers = len(prepped)
    cin_pad = prepped[0]["w1"].shape[1]
    cout_pad = prepped[-1]["wm"].shape[0]

    # NCHW -> (C, N*H*W): channels on sublanes, pixels on lanes.
    x2d = x_nchw.transpose(1, 0, 2, 3).reshape(C, P)

    tile_p = _choose_tile_p(P)
    ppad = (-P) % tile_p
    cpad = cin_pad - C
    if ppad or cpad:
        x2d = jnp.pad(x2d, ((0, cpad), (0, ppad)))
    Pp = P + ppad

    # Flatten prepped params; all weights are tiny and stay VMEM-resident.
    flat = []
    in_specs = [pl.BlockSpec((cin_pad, tile_p), lambda i: (0, i))]   # x tile
    for p in prepped:
        for name in ("w1", "b1", "wm", "bm"):
            arr = p[name]
            flat.append(arr)
            in_specs.append(pl.BlockSpec(arr.shape, lambda i: (0, 0)))

    out = pl.pallas_call(
        functools.partial(_feature_proc_kernel, n_layers),
        out_shape=jax.ShapeDtypeStruct((cout_pad, Pp), jnp.float32),
        grid=(Pp // tile_p,),
        in_specs=in_specs,
        out_specs=pl.BlockSpec((cout_pad, tile_p), lambda i: (0, i)),
        compiler_params=pltpu.CompilerParams(
            dimension_semantics=("parallel",)),
    )(x2d, *flat)

    # Drop channel/pixel padding and restore NCHW.
    out = out[:out_channels, :P]
    return out.reshape(out_channels, N, H, W).transpose(1, 0, 2, 3)


# ---------------------------------------------------------------------------
# Pure-JAX eval-mode reference (matches the PyTorch module semantics)
# ---------------------------------------------------------------------------
def _reference_forward(x_nchw, raw_params):
    hp = jax.lax.Precision.HIGHEST
    x = jnp.transpose(x_nchw, (0, 2, 3, 1)).astype(jnp.float32)   # NHWC
    for p in raw_params:
        s1, b1 = _fold_bn(*p["bn1"])
        s2, b2 = _fold_bn(*p["bn2"])
        sr, br = _fold_bn(*p["bnr"])
        h = jnp.maximum(jnp.matmul(x, p["w1"].T, precision=hp) * s1 + b1, 0.0)
        y = jnp.matmul(h, p["w2"].T, precision=hp) * s2 + b2
        r = jnp.matmul(x, p["wr"].T, precision=hp) * sr + br
        x = jnp.maximum(y + r, 0.0)
    return jnp.transpose(x, (0, 3, 1, 2))


if __name__ == "__main__":
    in_channels = 4
    layer_mults = [2, 4]            # channels: 4 -> 8 -> 16
    N, H, W = 2, 16, 16

    key = jax.random.PRNGKey(0)
    k_x, k_p = jax.random.split(key)
    x = jax.random.normal(k_x, (N, in_channels, H, W), jnp.float32)

    raw = make_feature_proc_params(k_p, in_channels, layer_mults)
    prepped, out_channels = prepare_params(raw, in_channels)

    out = feature_proc_forward(x, prepped, out_channels)
    out = jax.block_until_ready(out)

    assert out.shape == (N, in_channels * layer_mults[-1], H, W), out.shape
    assert bool(jnp.all(out >= 0.0))                    # final ReLU

    ref = _reference_forward(x, raw)
    err = float(jnp.max(jnp.abs(out - ref)))
    assert jnp.allclose(out, ref, atol=2e-2, rtol=2e-2), err

    print("KERNEL_OK")
</pallas_src>

<mosaic_0001>
module attributes {stable_mosaic.version = 11 : i64} {
  func.func @_feature_proc_kernel(%arg0: i32, %arg1: memref<8x256xf32, #tpu.memory_space<vmem>>, %arg2: memref<8x8xf32, #tpu.memory_space<vmem>>, %arg3: memref<8x1xf32, #tpu.memory_space<vmem>>, %arg4: memref<8x16xf32, #tpu.memory_space<vmem>>, %arg5: memref<8x1xf32, #tpu.memory_space<vmem>>, %arg6: memref<16x8xf32, #tpu.memory_space<vmem>>, %arg7: memref<16x1xf32, #tpu.memory_space<vmem>>, %arg8: memref<16x24xf32, #tpu.memory_space<vmem>>, %arg9: memref<16x1xf32, #tpu.memory_space<vmem>>, %arg10: memref<16x256xf32, #tpu.memory_space<vmem>>) attributes {dimension_semantics = [#tpu.dimension_semantics<parallel>], iteration_bounds = array<i64: 2>, scalar_prefetch = 0 : i64, scratch_operands = 0 : i64, tpu.core_type = #tpu.core_type<tc>, window_params = [{transform_indices = @transform_0, window_bounds = array<i64: 8, 256>}, {pipeline_mode = #tpu.pipeline_mode<synchronous>, transform_indices = @transform_1, window_bounds = array<i64: 8, 8>}, {pipeline_mode = #tpu.pipeline_mode<synchronous>, transform_indices = @transform_2, window_bounds = array<i64: 8, 1>}, {pipeline_mode = #tpu.pipeline_mode<synchronous>, transform_indices = @transform_3, window_bounds = array<i64: 8, 16>}, {pipeline_mode = #tpu.pipeline_mode<synchronous>, transform_indices = @transform_4, window_bounds = array<i64: 8, 1>}, {pipeline_mode = #tpu.pipeline_mode<synchronous>, transform_indices = @transform_5, window_bounds = array<i64: 16, 8>}, {pipeline_mode = #tpu.pipeline_mode<synchronous>, transform_indices = @transform_6, window_bounds = array<i64: 16, 1>}, {pipeline_mode = #tpu.pipeline_mode<synchronous>, transform_indices = @transform_7, window_bounds = array<i64: 16, 24>}, {pipeline_mode = #tpu.pipeline_mode<synchronous>, transform_indices = @transform_8, window_bounds = array<i64: 16, 1>}, {transform_indices = @transform_9, window_bounds = array<i64: 16, 256>}]} {
    %c0 = arith.constant 0 : index
    %c0_0 = arith.constant 0 : index
    %0 = vector.load %arg1[%c0, %c0_0] : memref<8x256xf32, #tpu.memory_space<vmem>>, vector<8x256xf32>
    %c0_1 = arith.constant 0 : index
    %c0_2 = arith.constant 0 : index
    %1 = vector.load %arg2[%c0_1, %c0_2] : memref<8x8xf32, #tpu.memory_space<vmem>>, vector<8x8xf32>
    %cst = arith.constant dense<0.000000e+00> : vector<8x256xf32>
    %2 = tpu.matmul %1, %0, %cst {dimension_numbers = #tpu.dot_dimension_numbers<[1], [0], [0], [1], [0, 0, 1, 1], [], []>} : vector<8x8xf32>, vector<8x256xf32>, vector<8x256xf32> -> vector<8x256xf32>
    %c0_3 = arith.constant 0 : index
    %c0_4 = arith.constant 0 : index
    %3 = vector.load %arg3[%c0_3, %c0_4] : memref<8x1xf32, #tpu.memory_space<vmem>>, vector<8x1xf32>
    %4 = vector.broadcast %3 : vector<8x1xf32> to vector<8x256xf32>
    %5 = arith.addf %2, %4 : vector<8x256xf32>
    %cst_5 = arith.constant 0.000000e+00 : f32
    %6 = vector.broadcast %cst_5 : f32 to vector<8x256xf32>
    %7 = arith.maximumf %5, %6 : vector<8x256xf32>
    %8 = tpu.concatenate %0, %7 in 0 : vector<8x256xf32>, vector<8x256xf32> -> vector<16x256xf32>
    %c0_6 = arith.constant 0 : index
    %c0_7 = arith.constant 0 : index
    %9 = vector.load %arg4[%c0_6, %c0_7] : memref<8x16xf32, #tpu.memory_space<vmem>>, vector<8x16xf32>
    %cst_8 = arith.constant dense<0.000000e+00> : vector<8x256xf32>
    %10 = tpu.matmul %9, %8, %cst_8 {dimension_numbers = #tpu.dot_dimension_numbers<[1], [0], [0], [1], [0, 0, 1, 1], [], []>} : vector<8x16xf32>, vector<16x256xf32>, vector<8x256xf32> -> vector<8x256xf32>
    %c0_9 = arith.constant 0 : index
    %c0_10 = arith.constant 0 : index
    %11 = vector.load %arg5[%c0_9, %c0_10] : memref<8x1xf32, #tpu.memory_space<vmem>>, vector<8x1xf32>
    %12 = vector.broadcast %11 : vector<8x1xf32> to vector<8x256xf32>
    %13 = arith.addf %10, %12 : vector<8x256xf32>
    %cst_11 = arith.constant 0.000000e+00 : f32
    %14 = vector.broadcast %cst_11 : f32 to vector<8x256xf32>
    %15 = arith.maximumf %13, %14 : vector<8x256xf32>
    %c0_12 = arith.constant 0 : index
    %c0_13 = arith.constant 0 : index
    %16 = vector.load %arg6[%c0_12, %c0_13] : memref<16x8xf32, #tpu.memory_space<vmem>>, vector<16x8xf32>
    %cst_14 = arith.constant dense<0.000000e+00> : vector<16x256xf32>
    %17 = tpu.matmul %16, %15, %cst_14 {dimension_numbers = #tpu.dot_dimension_numbers<[1], [0], [0], [1], [0, 0, 1, 1], [], []>} : vector<16x8xf32>, vector<8x256xf32>, vector<16x256xf32> -> vector<16x256xf32>
    %c0_15 = arith.constant 0 : index
    %c0_16 = arith.constant 0 : index
    %18 = vector.load %arg7[%c0_15, %c0_16] : memref<16x1xf32, #tpu.memory_space<vmem>>, vector<16x1xf32>
    %19 = vector.broadcast %18 : vector<16x1xf32> to vector<16x256xf32>
    %20 = arith.addf %17, %19 : vector<16x256xf32>
    %cst_17 = arith.constant 0.000000e+00 : f32
    %21 = vector.broadcast %cst_17 : f32 to vector<16x256xf32>
    %22 = arith.maximumf %20, %21 : vector<16x256xf32>
    %23 = tpu.concatenate %15, %22 in 0 : vector<8x256xf32>, vector<16x256xf32> -> vector<24x256xf32>
    %c0_18 = arith.constant 0 : index
    %c0_19 = arith.constant 0 : index
    %24 = vector.load %arg8[%c0_18, %c0_19] : memref<16x24xf32, #tpu.memory_space<vmem>>, vector<16x24xf32>
    %cst_20 = arith.constant dense<0.000000e+00> : vector<16x256xf32>
    %25 = tpu.matmul %24, %23, %cst_20 {dimension_numbers = #tpu.dot_dimension_numbers<[1], [0], [0], [1], [0, 0, 1, 1], [], []>} : vector<16x24xf32>, vector<24x256xf32>, vector<16x256xf32> -> vector<16x256xf32>
    %c0_21 = arith.constant 0 : index
    %c0_22 = arith.constant 0 : index
    %26 = vector.load %arg9[%c0_21, %c0_22] : memref<16x1xf32, #tpu.memory_space<vmem>>, vector<16x1xf32>
    %27 = vector.broadcast %26 : vector<16x1xf32> to vector<16x256xf32>
    %28 = arith.addf %25, %27 : vector<16x256xf32>
    %cst_23 = arith.constant 0.000000e+00 : f32
    %29 = vector.broadcast %cst_23 : f32 to vector<16x256xf32>
    %30 = arith.maximumf %28, %29 : vector<16x256xf32>
    %c0_24 = arith.constant 0 : index
    %c0_25 = arith.constant 0 : index
    %31 = vector.load %arg10[%c0_24, %c0_25] : memref<16x256xf32, #tpu.memory_space<vmem>>, vector<16x256xf32>
    tpu.vector_store %arg10[%c0_24, %c0_25], %30 {strides = array<i32>} : memref<16x256xf32, #tpu.memory_space<vmem>>, vector<16x256xf32>,
    return
  }
  func.func @transform_0(%arg0: i32) -> (i32, i32) {
    %c0_i32 = arith.constant 0 : i32
    %c0_i32_0 = arith.constant 0 : i32
    return %c0_i32, %arg0 : i32, i32
  }
  func.func @transform_1(%arg0: i32) -> (i32, i32) {
    %c0_i32 = arith.constant 0 : i32
    %c0_i32_0 = arith.constant 0 : i32
    %c0_i32_1 = arith.constant 0 : i32
    return %c0_i32, %c0_i32_0 : i32, i32
  }
  func.func @transform_2(%arg0: i32) -> (i32, i32) {
    %c0_i32 = arith.constant 0 : i32
    %c0_i32_0 = arith.constant 0 : i32
    %c0_i32_1 = arith.constant 0 : i32
    return %c0_i32, %c0_i32_0 : i32, i32
  }
  func.func @transform_3(%arg0: i32) -> (i32, i32) {
    %c0_i32 = arith.constant 0 : i32
    %c0_i32_0 = arith.constant 0 : i32
    %c0_i32_1 = arith.constant 0 : i32
    return %c0_i32, %c0_i32_0 : i32, i32
  }
  func.func @transform_4(%arg0: i32) -> (i32, i32) {
    %c0_i32 = arith.constant 0 : i32
    %c0_i32_0 = arith.constant 0 : i32
    %c0_i32_1 = arith.constant 0 : i32
    return %c0_i32, %c0_i32_0 : i32, i32
  }
  func.func @transform_5(%arg0: i32) -> (i32, i32) {
    %c0_i32 = arith.constant 0 : i32
    %c0_i32_0 = arith.constant 0 : i32
    %c0_i32_1 = arith.constant 0 : i32
    return %c0_i32, %c0_i32_0 : i32, i32
  }
  func.func @transform_6(%arg0: i32) -> (i32, i32) {
    %c0_i32 = arith.constant 0 : i32
    %c0_i32_0 = arith.constant 0 : i32
    %c0_i32_1 = arith.constant 0 : i32
    return %c0_i32, %c0_i32_0 : i32, i32
  }
  func.func @transform_7(%arg0: i32) -> (i32, i32) {
    %c0_i32 = arith.constant 0 : i32
    %c0_i32_0 = arith.constant 0 : i32
    %c0_i32_1 = arith.constant 0 : i32
    return %c0_i32, %c0_i32_0 : i32, i32
  }
  func.func @transform_8(%arg0: i32) -> (i32, i32) {
    %c0_i32 = arith.constant 0 : i32
    %c0_i32_0 = arith.constant 0 : i32
    %c0_i32_1 = arith.constant 0 : i32
    return %c0_i32, %c0_i32_0 : i32, i32
  }
  func.func @transform_9(%arg0: i32) -> (i32, i32) {
    %c0_i32 = arith.constant 0 : i32
    %c0_i32_0 = arith.constant 0 : i32
    return %c0_i32, %arg0 : i32, i32
  }
}

</mosaic_0001>

<llo_original>
// kernel: feature_proc_forward.1
$region0: #{feature_proc_forward.1}
  #allocation0 [shape = 'u32[]', space=smem, size = 0x4, offset = 0x4, fixed_abs, tag = 'smem constant byte address 0x4 - core index']
  #allocation1 [shape = 'u32[144,128]{1,0:T(1,128)}', space=vmem, size = 0x12000, scoped, tag = 'internal scratch']
  %s0 = inlined_call_operand.vmem [shape: f32[8,512], index: 0, kind: input, shape index: {}]
  %s1 = inlined_call_operand.vmem [shape: f32[8,8], index: 1, kind: input, shape index: {}]
  %s2 = inlined_call_operand.vmem [shape: f32[8,1], index: 2, kind: input, shape index: {}]
  %s3 = inlined_call_operand.vmem [shape: f32[8,16], index: 3, kind: input, shape index: {}]
  %s4 = inlined_call_operand.vmem [shape: f32[8,1], index: 4, kind: input, shape index: {}]
  %s5 = inlined_call_operand.vmem [shape: f32[16,8], index: 5, kind: input, shape index: {}]
  %s6 = inlined_call_operand.vmem [shape: f32[16,1], index: 6, kind: input, shape index: {}]
  %s7 = inlined_call_operand.vmem [shape: f32[16,24], index: 7, kind: input, shape index: {}]
  %s8 = inlined_call_operand.vmem [shape: f32[16,1], index: 8, kind: input, shape index: {}]
  %s9 = inlined_call_operand.vmem [shape: f32[16,512], index: 9, kind: output, shape index: {}]
  %s10 = sld [smem:[#allocation0]]
  $region88: #{feature_proc_forward.1} parent=0
    _
  %s12 = ssub.s32 1, %s10
  %s13 = scalar_select 0, %s12, %s10
  $region1: #{feature_proc_forward.1} parent=0
    #allocation2 [shape = 'u8[32768]{0}', space=vmem, size = 0x8000, scoped, tag = 'output window, operand 0']
    loop: start=0, step=1, limit=4
    $region2: #{feature_proc_forward.1} parent=1 // loop_pre_header
      _
    $region3: #{feature_proc_forward.1} parent=1 // loop_header
      %s15 = sphi 0, %s19
      %p16 = scmp.ge.s32.totalorder %s15, 4
      %s25 = sphi 0, %s27
      %s28 = sphi 0, %s25
      %s29 = sphi 0, %s28
      %s45 = sphi 0, %s29
      %s49 = sphi 0, %s49
      %s51 = sphi 0, %s49
      %s52 = sphi 0, %s51
      %s66 = sphi 0, %s52
      %s70 = sphi 0, %s70
      %s72 = sphi 0, %s70
      %s73 = sphi 0, %s72
      %s87 = sphi 0, %s73
      %s91 = sphi 0, %s91
      %s93 = sphi 0, %s91
      %s94 = sphi 0, %s93
      %s108 = sphi 0, %s94
      %s112 = sphi 0, %s112
      %s114 = sphi 0, %s112
      %s115 = sphi 0, %s114
      %s129 = sphi 0, %s115
      %s133 = sphi 0, %s133
      %s135 = sphi 0, %s133
      %s136 = sphi 0, %s135
      %s150 = sphi 0, %s136
      %s154 = sphi 0, %s154
      %s156 = sphi 0, %s154
      %s157 = sphi 0, %s156
      %s171 = sphi 0, %s157
      %s175 = sphi 0, %s175
      %s177 = sphi 0, %s175
      %s178 = sphi 0, %s177
      %s192 = sphi 0, %s178
      %s196 = sphi 0, %s196
      %s198 = sphi 0, %s196
      %s199 = sphi 0, %s198
      %s213 = sphi 0, %s199
      %s219 = sphi 0, %s221
      %s222 = sphi 0, %s219
      %s223 = sphi 0, %s222
      %s239 = sphi 0, %s223
    $region4: #{feature_proc_forward.1} parent=1 // loop_header_branch
      %18 = sbr.rel (%p16) target = $region8
    $region5: #{feature_proc_forward.1} parent=1 // loop_body
      %s20 = ssub.s32 %s15, 1
      %s21 = ssub.s32 %s15, 2
      %s22 = sadd.s32 %s15, 1
      %s23 = ssub.s32 %s15, %s22
      %p24 = scmp.eq.s32.totalorder %s23, 0
      %s26 = sadd.s32 %s25, 1
      %s27 = scalar_select %p24, %s25, %s26
      %p30 = pneg %p24
      %p31 = scmp.eq.s32.totalorder %s15, 1
      %p32 = por %p30, %p31
      %p33 = scmp.ne.s32.totalorder %s25, %s28
      %p34 = scmp.eq.s32.totalorder %s15, 0
      %p35 = por %p33, %p34
      %p36 = scmp.ne.s32.totalorder %s25, %s28
      %p37 = scmp.eq.s32.totalorder %s20, 1
      %p38 = por %p36, %p37
      %p39 = scmp.ne.s32.totalorder %s28, %s29
      %p40 = scmp.eq.s32.totalorder %s20, 0
      %p41 = por %p39, %p40
      %p42 = scmp.ne.s32.totalorder %s28, %s29
      %p43 = scmp.eq.s32.totalorder %s21, 1
      %p44 = por %p42, %p43
      %p46 = scmp.ne.s32.totalorder %s29, %s45
      %p47 = scmp.eq.s32.totalorder %s21, 0
      %p48 = por %p46, %p47
      %s50 = sadd.s32 %s49, 1
      %p53 = scmp.eq.s32.totalorder %s15, 1
      %p54 = scmp.ne.s32.totalorder %s49, %s51
      %p55 = scmp.eq.s32.totalorder %s15, 0
      %p56 = por %p54, %p55
      %p57 = scmp.ne.s32.totalorder %s49, %s51
      %p58 = scmp.eq.s32.totalorder %s20, 1
      %p59 = por %p57, %p58
      %p60 = scmp.ne.s32.totalorder %s51, %s52
      %p61 = scmp.eq.s32.totalorder %s20, 0
      %p62 = por %p60, %p61
      %p63 = scmp.ne.s32.totalorder %s51, %s52
      %p64 = scmp.eq.s32.totalorder %s21, 1
      %p65 = por %p63, %p64
      %p67 = scmp.ne.s32.totalorder %s52, %s66
      %p68 = scmp.eq.s32.totalorder %s21, 0
      %p69 = por %p67, %p68
      %s71 = sadd.s32 %s70, 1
      %p74 = scmp.eq.s32.totalorder %s15, 1
      %p75 = scmp.ne.s32.totalorder %s70, %s72
      %p76 = scmp.eq.s32.totalorder %s15, 0
      %p77 = por %p75, %p76
      %p78 = scmp.ne.s32.totalorder %s70, %s72
      %p79 = scmp.eq.s32.totalorder %s20, 1
      %p80 = por %p78, %p79
      %p81 = scmp.ne.s32.totalorder %s72, %s73
      %p82 = scmp.eq.s32.totalorder %s20, 0
      %p83 = por %p81, %p82
      %p84 = scmp.ne.s32.totalorder %s72, %s73
      %p85 = scmp.eq.s32.totalorder %s21, 1
      %p86 = por %p84, %p85
      %p88 = scmp.ne.s32.totalorder %s73, %s87
      %p89 = scmp.eq.s32.totalorder %s21, 0
      %p90 = por %p88, %p89
      %s92 = sadd.s32 %s91, 1
      %p95 = scmp.eq.s32.totalorder %s15, 1
      %p96 = scmp.ne.s32.totalorder %s91, %s93
      %p97 = scmp.eq.s32.totalorder %s15, 0
      %p98 = por %p96, %p97
      %p99 = scmp.ne.s32.totalorder %s91, %s93
      %p100 = scmp.eq.s32.totalorder %s20, 1
      %p101 = por %p99, %p100
      %p102 = scmp.ne.s32.totalorder %s93, %s94
      %p103 = scmp.eq.s32.totalorder %s20, 0
      %p104 = por %p102, %p103
      %p105 = scmp.ne.s32.totalorder %s93, %s94
      %p106 = scmp.eq.s32.totalorder %s21, 1
      %p107 = por %p105, %p106
      %p109 = scmp.ne.s32.totalorder %s94, %s108
      %p110 = scmp.eq.s32.totalorder %s21, 0
      %p111 = por %p109, %p110
      %s113 = sadd.s32 %s112, 1
      %p116 = scmp.eq.s32.totalorder %s15, 1
      %p117 = scmp.ne.s32.totalorder %s112, %s114
      %p118 = scmp.eq.s32.totalorder %s15, 0
      %p119 = por %p117, %p118
      %p120 = scmp.ne.s32.totalorder %s112, %s114
      %p121 = scmp.eq.s32.totalorder %s20, 1
      %p122 = por %p120, %p121
      %p123 = scmp.ne.s32.totalorder %s114, %s115
      %p124 = scmp.eq.s32.totalorder %s20, 0
      %p125 = por %p123, %p124
      %p126 = scmp.ne.s32.totalorder %s114, %s115
      %p127 = scmp.eq.s32.totalorder %s21, 1
      %p128 = por %p126, %p127
      %p130 = scmp.ne.s32.totalorder %s115, %s129
      %p131 = scmp.eq.s32.totalorder %s21, 0
      %p132 = por %p130, %p131
      %s134 = sadd.s32 %s133, 1
      %p137 = scmp.eq.s32.totalorder %s15, 1
      %p138 = scmp.ne.s32.totalorder %s133, %s135
      %p139 = scmp.eq.s32.totalorder %s15, 0
      %p140 = por %p138, %p139
      %p141 = scmp.ne.s32.totalorder %s133, %s135
      %p142 = scmp.eq.s32.totalorder %s20, 1
      %p143 = por %p141, %p142
      %p144 = scmp.ne.s32.totalorder %s135, %s136
      %p145 = scmp.eq.s32.totalorder %s20, 0
      %p146 = por %p144, %p145
      %p147 = scmp.ne.s32.totalorder %s135, %s136
      %p148 = scmp.eq.s32.totalorder %s21, 1
      %p149 = por %p147, %p148
      %p151 = scmp.ne.s32.totalorder %s136, %s150
      %p152 = scmp.eq.s32.totalorder %s21, 0
      %p153 = por %p151, %p152
      %s155 = sadd.s32 %s154, 1
      %p158 = scmp.eq.s32.totalorder %s15, 1
      %p159 = scmp.ne.s32.totalorder %s154, %s156
      %p160 = scmp.eq.s32.totalorder %s15, 0
      %p161 = por %p159, %p160
      %p162 = scmp.ne.s32.totalorder %s154, %s156
      %p163 = scmp.eq.s32.totalorder %s20, 1
      %p164 = por %p162, %p163
      %p165 = scmp.ne.s32.totalorder %s156, %s157
      %p166 = scmp.eq.s32.totalorder %s20, 0
      %p167 = por %p165, %p166
      %p168 = scmp.ne.s32.totalorder %s156, %s157
      %p169 = scmp.eq.s32.totalorder %s21, 1
      %p170 = por %p168, %p169
      %p172 = scmp.ne.s32.totalorder %s157, %s171
      %p173 = scmp.eq.s32.totalorder %s21, 0
      %p174 = por %p172, %p173
      %s176 = sadd.s32 %s175, 1
      %p179 = scmp.eq.s32.totalorder %s15, 1
      %p180 = scmp.ne.s32.totalorder %s175, %s177
      %p181 = scmp.eq.s32.totalorder %s15, 0
      %p182 = por %p180, %p181
      %p183 = scmp.ne.s32.totalorder %s175, %s177
      %p184 = scmp.eq.s32.totalorder %s20, 1
      %p185 = por %p183, %p184
      %p186 = scmp.ne.s32.totalorder %s177, %s178
      %p187 = scmp.eq.s32.totalorder %s20, 0
      %p188 = por %p186, %p187
      %p189 = scmp.ne.s32.totalorder %s177, %s178
      %p190 = scmp.eq.s32.totalorder %s21, 1
      %p191 = por %p189, %p190
      %p193 = scmp.ne.s32.totalorder %s178, %s192
      %p194 = scmp.eq.s32.totalorder %s21, 0
      %p195 = por %p193, %p194
      %s197 = sadd.s32 %s196, 1
      %p200 = scmp.eq.s32.totalorder %s15, 1
      %p201 = scmp.ne.s32.totalorder %s196, %s198
      %p202 = scmp.eq.s32.totalorder %s15, 0
      %p203 = por %p201, %p202
      %p204 = scmp.ne.s32.totalorder %s196, %s198
      %p205 = scmp.eq.s32.totalorder %s20, 1
      %p206 = por %p204, %p205
      %p207 = scmp.ne.s32.totalorder %s198, %s199
      %p208 = scmp.eq.s32.totalorder %s20, 0
      %p209 = por %p207, %p208
      %p210 = scmp.ne.s32.totalorder %s198, %s199
      %p211 = scmp.eq.s32.totalorder %s21, 1
      %p212 = por %p210, %p211
      %p214 = scmp.ne.s32.totalorder %s199, %s213
      %p215 = scmp.eq.s32.totalorder %s21, 0
      %p216 = por %p214, %p215
      %s217 = ssub.s32 %s15, %s22
      %p218 = scmp.eq.s32.totalorder %s217, 0
      %s220 = sadd.s32 %s219, 1
      %s221 = scalar_select %p218, %s219, %s220
      %p224 = pneg %p218
      %p225 = scmp.eq.s32.totalorder %s15, 1
      %p226 = por %p224, %p225
      %p227 = scmp.ne.s32.totalorder %s219, %s222
      %p228 = scmp.eq.s32.totalorder %s15, 0
      %p229 = por %p227, %p228
      %p230 = scmp.ne.s32.totalorder %s219, %s222
      %p231 = scmp.eq.s32.totalorder %s20, 1
      %p232 = por %p230, %p231
      %p233 = scmp.ne.s32.totalorder %s222, %s223
      %p234 = scmp.eq.s32.totalorder %s20, 0
      %p235 = por %p233, %p234
      %p236 = scmp.ne.s32.totalorder %s222, %s223
      %p237 = scmp.eq.s32.totalorder %s21, 1
      %p238 = por %p236, %p237
      %p240 = scmp.ne.s32.totalorder %s223, %s239
      %p241 = scmp.eq.s32.totalorder %s21, 0
      %p242 = por %p240, %p241
      %p243 = scmp.le.s32.totalorder 1, %s15
      %p244 = scmp.lt.s32.totalorder %s15, 3
      %p245 = pnand %p243, %p244
      %p246 = pneg %p245
      // Predicated region
      $region9: #{feature_proc_forward.1} parent=5 // pred_check
        _
      $region10: #{feature_proc_forward.1} parent=5 // pred_check_branch
        %248 = sbr.rel (%p245) target = $region12
      $region11: #{feature_proc_forward.1} parent=5 // pred_region
        %s249 = ssub.s32 %s15, 1
        // Predicated region
        $region13: #{feature_proc_forward.1} parent=11 // pred_check
          %p250 = pneg %p62
        $region14: #{feature_proc_forward.1} parent=11 // pred_check_branch
          %252 = sbr.rel (%p250) target = $region16
        $region15: #{feature_proc_forward.1} parent=11 // pred_region
          _
        $region16: #{feature_proc_forward.1} parent=11 // pred_fallthru
          _
        // Predicated region
        $region17: #{feature_proc_forward.1} parent=11 // pred_check
          %p253 = pneg %p83
        $region18: #{feature_proc_forward.1} parent=11 // pred_check_branch
          %255 = sbr.rel (%p253) target = $region20
        $region19: #{feature_proc_forward.1} parent=11 // pred_region
          _
        $region20: #{feature_proc_forward.1} parent=11 // pred_fallthru
          _
        // Predicated region
        $region21: #{feature_proc_forward.1} parent=11 // pred_check
          %p256 = pneg %p104
        $region22: #{feature_proc_forward.1} parent=11 // pred_check_branch
          %258 = sbr.rel (%p256) target = $region24
        $region23: #{feature_proc_forward.1} parent=11 // pred_region
          _
        $region24: #{feature_proc_forward.1} parent=11 // pred_fallthru
          _
        // Predicated region
        $region25: #{feature_proc_forward.1} parent=11 // pred_check
          %p259 = pneg %p125
        $region26: #{feature_proc_forward.1} parent=11 // pred_check_branch
          %261 = sbr.rel (%p259) target = $region28
        $region27: #{feature_proc_forward.1} parent=11 // pred_region
          _
        $region28: #{feature_proc_forward.1} parent=11 // pred_fallthru
          _
        // Predicated region
        $region29: #{feature_proc_forward.1} parent=11 // pred_check
          %p262 = pneg %p146
        $region30: #{feature_proc_forward.1} parent=11 // pred_check_branch
          %264 = sbr.rel (%p262) target = $region32
        $region31: #{feature_proc_forward.1} parent=11 // pred_region
          _
        $region32: #{feature_proc_forward.1} parent=11 // pred_fallthru
          _
        // Predicated region
        $region33: #{feature_proc_forward.1} parent=11 // pred_check
          %p265 = pneg %p167
        $region34: #{feature_proc_forward.1} parent=11 // pred_check_branch
          %267 = sbr.rel (%p265) target = $region36
        $region35: #{feature_proc_forward.1} parent=11 // pred_region
          _
        $region36: #{feature_proc_forward.1} parent=11 // pred_fallthru
          _
        // Predicated region
        $region37: #{feature_proc_forward.1} parent=11 // pred_check
          %p268 = pneg %p188
        $region38: #{feature_proc_forward.1} parent=11 // pred_check_branch
          %270 = sbr.rel (%p268) target = $region40
        $region39: #{feature_proc_forward.1} parent=11 // pred_region
          _
        $region40: #{feature_proc_forward.1} parent=11 // pred_fallthru
          _
        // Predicated region
        $region41: #{feature_proc_forward.1} parent=11 // pred_check
          %p271 = pneg %p209
        $region42: #{feature_proc_forward.1} parent=11 // pred_check_branch
          %273 = sbr.rel (%p271) target = $region44
        $region43: #{feature_proc_forward.1} parent=11 // pred_region
          _
        $region44: #{feature_proc_forward.1} parent=11 // pred_fallthru
          _
      $region12: #{feature_proc_forward.1} parent=5 // pred_fallthru
        _
      %p274 = scmp.lt.s32.totalorder %s15, 2
      // Predicated region
      $region45: #{feature_proc_forward.1} parent=5 // pred_check
        %p275 = pneg %p274
      $region46: #{feature_proc_forward.1} parent=5 // pred_check_branch
        %277 = sbr.rel (%p275) target = $region48
      $region47: #{feature_proc_forward.1} parent=5 // pred_region
        // Predicated region
        $region49: #{feature_proc_forward.1} parent=47 // pred_check
          %p278 = pneg %p35
        $region50: #{feature_proc_forward.1} parent=47 // pred_check_branch
          %280 = sbr.rel (%p278) target = $region52
        $region51: #{feature_proc_forward.1} parent=47 // pred_region
          %s281 = smul.u32 2, %s15
          %p282 = scmp.lt.s32.totalorder %s281, 3
          %s283 = scalar_select %p282, %s281, 3
          %s284 = smul.addr %s283, 8
          %s285 = scalar_lea.vmem %s0, %s284
          %s286 = smul.u32 2, %s15
        $region52: #{feature_proc_forward.1} parent=47 // pred_fallthru
          _
      $region48: #{feature_proc_forward.1} parent=5 // pred_fallthru
        _
      %p287 = scmp.le.s32.totalorder 1, %s15
      %p288 = scmp.lt.s32.totalorder %s15, 3
      %p289 = pnand %p287, %p288
      %p290 = pneg %p289
      // Predicated region
      $region53: #{feature_proc_forward.1} parent=5 // pred_check
        _
      $region54: #{feature_proc_forward.1} parent=5 // pred_check_branch
        %292 = sbr.rel (%p289) target = $region56
      $region55: #{feature_proc_forward.1} parent=5 // pred_region
        %s293 = ssub.s32 %s15, 1
        %s294 = smul.u32 2, %s20
        %p295 = scmp.lt.s32.totalorder %s294, 3
        %s296 = scalar_select %p295, %s294, 3
        %s297 = smul.addr %s296, 8
        %s298 = scalar_lea.vmem %s0, %s297
        %p299 = pneg %p41
        %p300 = pneg %p38
        %p301 = pneg %p62
        %p302 = pneg %p59
        %p303 = pneg %p83
        %p304 = pneg %p80
        %p305 = pneg %p104
        %p306 = pneg %p101
        %p307 = pneg %p125
        %p308 = pneg %p122
        %p309 = pneg %p146
        %p310 = pneg %p143
        %p311 = pneg %p167
        %p312 = pneg %p164
        %p313 = pneg %p188
        %p314 = pneg %p185
        %p315 = pneg %p209
        %p316 = pneg %p206
        %p317 = pneg %p235
        %p318 = pneg %p232
        %s319 = sand.u32 %s222, 1
        %s320 = sand.u32 %s222, 1
        %s321 = smul.addr %s320, 32
        %s322 = scalar_lea.vmem [#allocation2], %s321
        %s323 = smul.u32 2, %s20
        %p324 = scmp.lt.s32.totalorder %s323, 3
        %s325 = scalar_select %p324, %s323, 3
        %s326 = smul.addr %s325, 8
        %s327 = scalar_lea.vmem %s0, %s326
        %s328 = smul.u32 2, %s20
        %s329 = smul.u32 2, %s20
        %v330 = vld [vmem:[%s327] sm:$0xff]
        %v331 = vld [vmem:[%s327 + $0x8] sm:$0xff]
        %v332 = vld [vmem:[%s1] sm:$0xff]
        %v333 = vld [vmem:[%s2] sm:$0xff]
        %335 = vset.pattern.permute.xlu0 0
        %336 = vperm.xlu0 %335, %v333
        %v337 = vpop.permute.xlu0 %336
        %vm339 = vcmask 64512
        %v341 = vsel %vm339, %v332, 0
        %343 = vmatprep.subr.mxu0 0.0
        %344 = vmatpush1.msra.mxu0 0.0
        %345 = vmatprep.subr.mxu0 0.0
        %346 = vmatpush1.msra.mxu0 0.0
        %347 = vmatprep.subr.mxu0 0.0
        %348 = vmatpush1.msra.mxu0 0.0
        %349 = vmatprep.subr.mxu0 0.0
        %350 = vmatpush1.msra.mxu0 0.0
        %351 = vmatprep.subr.mxu0 0.0
        %352 = vmatpush1.msra.mxu0 0.0
        %353 = vmatprep.subr.mxu0 0.0
        %354 = vmatpush1.msra.mxu0 0.0
        %355 = vmatprep.subr.mxu0 0.0
        %356 = vmatpush1.msra.mxu0 0.0
        %357 = vmatprep.subr.mxu0 0.0
        %358 = vmatpush1.msra.mxu0 0.0
        %359 = vmatprep.subr.mxu0 0.0
        %360 = vmatpush1.msra.mxu0 0.0
        %361 = vmatprep.subr.mxu0 0.0
        %362 = vmatpush1.msra.mxu0 0.0
        %363 = vmatprep.subr.mxu0 0.0
        %364 = vmatpush1.msra.mxu0 0.0
        %365 = vmatprep.subr.mxu0 0.0
        %366 = vmatpush1.msra.mxu0 0.0
        %367 = vmatprep.subr.mxu0 0.0
        %368 = vmatpush1.msra.mxu0 0.0
        %369 = vmatprep.subr.mxu0 0.0
        %370 = vmatpush1.msra.mxu0 0.0
        %371 = vmatprep.subr.mxu0 0.0
        %372 = vmatpush1.msra.mxu0 0.0
        %373 = vmatprep.subr.mxu0 %v331
        %374 = vmatpush1.msra.mxu0 %v330
        %375 = vmatprep.subr.mxu0 0.0
        %376 = vmatpush2.msra.mxu0 0.0
        %377 = vmatprep.subr.mxu0 0.0
        %378 = vmatpush2.msra.mxu0 0.0
        %379 = vmatprep.subr.mxu0 0.0
        %380 = vmatpush2.msra.mxu0 0.0
        %381 = vmatprep.subr.mxu0 0.0
        %382 = vmatpush2.msra.mxu0 0.0
        %383 = vmatprep.subr.mxu0 0.0
        %384 = vmatpush2.msra.mxu0 0.0
        %385 = vmatprep.subr.mxu0 0.0
        %386 = vmatpush2.msra.mxu0 0.0
        %387 = vmatprep.subr.mxu0 0.0
        %388 = vmatpush2.msra.mxu0 0.0
        %389 = vmatprep.subr.mxu0 0.0
        %390 = vmatpush2.msra.mxu0 0.0
        %391 = vmatprep.subr.mxu0 0.0
        %392 = vmatpush2.msra.mxu0 0.0
        %393 = vmatprep.subr.mxu0 0.0
        %394 = vmatpush2.msra.mxu0 0.0
        %395 = vmatprep.subr.mxu0 0.0
        %396 = vmatpush2.msra.mxu0 0.0
        %397 = vmatprep.subr.mxu0 0.0
        %398 = vmatpush2.msra.mxu0 0.0
        %399 = vmatprep.subr.mxu0 0.0
        %400 = vmatpush2.msra.mxu0 0.0
        %401 = vmatprep.subr.mxu0 0.0
        %402 = vmatpush2.msra.mxu0 0.0
        %403 = vmatprep.subr.mxu0 0.0
        %404 = vmatpush2.msra.mxu0 0.0
        %405 = vmatprep.subr.mxu0 0.0
        %406 = vmatpush2.msra.mxu0 0.0
        %407 = vmatprep.mubr.f32.mxu0 0.0
        %408 = vmatmul.mubr.f32.gmra.mxu0 %v341
        %v409 = vpop.f32.mrf.mxu0
        %v410 = vadd.f32 %v337, %v409
        %v411 = vpop.f32.mrf.mxu0
        %v412 = vadd.f32 %v337, %v411
        %413 = vdwg.mxu0
        %v414 = vmax.f32 %v410, 0.0
        %v415 = vmax.f32 %v412, 0.0
        %v416 = vld [vmem:[%s3] sm:$0xff]
        %v417 = vld [vmem:[%s4] sm:$0xff]
        %419 = vset.pattern.permute.xlu0 0
        %420 = vperm.xlu0 %419, %v417
        %v421 = vpop.permute.xlu0 %420
        %vm423 = vcmask 130048
        %v425 = vsel %vm423, %v416, 0
        %427 = vmatprep.subr.mxu0 0.0
        %428 = vmatpush1.msra.mxu0 0.0
        %429 = vmatprep.subr.mxu0 0.0
        %430 = vmatpush1.msra.mxu0 0.0
        %431 = vmatprep.subr.mxu0 0.0
        %432 = vmatpush1.msra.mxu0 0.0
        %433 = vmatprep.subr.mxu0 0.0
        %434 = vmatpush1.msra.mxu0 0.0
        %435 = vmatprep.subr.mxu0 0.0
        %436 = vmatpush1.msra.mxu0 0.0
        %437 = vmatprep.subr.mxu0 0.0
        %438 = vmatpush1.msra.mxu0 0.0
        %439 = vmatprep.subr.mxu0 0.0
        %440 = vmatpush1.msra.mxu0 0.0
        %441 = vmatprep.subr.mxu0 0.0
        %442 = vmatpush1.msra.mxu0 0.0
        %443 = vmatprep.subr.mxu0 0.0
        %444 = vmatpush1.msra.mxu0 0.0
        %445 = vmatprep.subr.mxu0 0.0
        %446 = vmatpush1.msra.mxu0 0.0
        %447 = vmatprep.subr.mxu0 0.0
        %448 = vmatpush1.msra.mxu0 0.0
        %449 = vmatprep.subr.mxu0 0.0
        %450 = vmatpush1.msra.mxu0 0.0
        %451 = vmatprep.subr.mxu0 0.0
        %452 = vmatpush1.msra.mxu0 0.0
        %453 = vmatprep.subr.mxu0 0.0
        %454 = vmatpush1.msra.mxu0 0.0
        %455 = vmatprep.subr.mxu0 %v415
        %456 = vmatpush1.msra.mxu0 %v414
        %457 = vmatprep.subr.mxu0 %v331
        %458 = vmatpush1.msra.mxu0 %v330
        %459 = vmatprep.subr.mxu0 0.0
        %460 = vmatpush2.msra.mxu0 0.0
        %461 = vmatprep.subr.mxu0 0.0
        %462 = vmatpush2.msra.mxu0 0.0
        %463 = vmatprep.subr.mxu0 0.0
        %464 = vmatpush2.msra.mxu0 0.0
        %465 = vmatprep.subr.mxu0 0.0
        %466 = vmatpush2.msra.mxu0 0.0
        %467 = vmatprep.subr.mxu0 0.0
        %468 = vmatpush2.msra.mxu0 0.0
        %469 = vmatprep.subr.mxu0 0.0
        %470 = vmatpush2.msra.mxu0 0.0
        %471 = vmatprep.subr.mxu0 0.0
        %472 = vmatpush2.msra.mxu0 0.0
        %473 = vmatprep.subr.mxu0 0.0
        %474 = vmatpush2.msra.mxu0 0.0
        %475 = vmatprep.subr.mxu0 0.0
        %476 = vmatpush2.msra.mxu0 0.0
        %477 = vmatprep.subr.mxu0 0.0
        %478 = vmatpush2.msra.mxu0 0.0
        %479 = vmatprep.subr.mxu0 0.0
        %480 = vmatpush2.msra.mxu0 0.0
        %481 = vmatprep.subr.mxu0 0.0
        %482 = vmatpush2.msra.mxu0 0.0
        %483 = vmatprep.subr.mxu0 0.0
        %484 = vmatpush2.msra.mxu0 0.0
        %485 = vmatprep.subr.mxu0 0.0
        %486 = vmatpush2.msra.mxu0 0.0
        %487 = vmatprep.subr.mxu0 0.0
        %488 = vmatpush2.msra.mxu0 0.0
        %489 = vmatprep.subr.mxu0 0.0
        %490 = vmatpush2.msra.mxu0 0.0
        %491 = vmatprep.mubr.f32.mxu0 0.0
        %492 = vmatmul.mubr.f32.gmra.mxu0 %v425
        %v493 = vpop.f32.mrf.mxu0
        %v494 = vadd.f32 %v421, %v493
        %v495 = vpop.f32.mrf.mxu0
        %v496 = vadd.f32 %v421, %v495
        %497 = vdwg.mxu0
        %v498 = vmax.f32 %v494, 0.0
        %v499 = vmax.f32 %v496, 0.0
        %v500 = vld [vmem:[%s5] sm:$0xff]
        %v501 = vld [vmem:[%s5 + $0x8] sm:$0xff]
        %v502 = vld [vmem:[%s6] sm:$0xff]
        %v503 = vld [vmem:[%s6 + $0x8] sm:$0xff]
        %505 = vset.pattern.permute.xlu0 0
        %506 = vperm.xlu0 %505, %v502
        %v507 = vpop.permute.xlu0 %506
        %510 = vset.pattern.permute.xlu0 0
        %511 = vperm.xlu0 %510, %v503
        %v512 = vpop.permute.xlu0 %511
        %v515 = vsel %vm339, %v500, 0
        %v518 = vsel %vm339, %v501, 0
        %520 = vmatprep.subr.mxu0 0.0
        %521 = vmatpush1.msra.mxu0 0.0
        %522 = vmatprep.subr.mxu0 0.0
        %523 = vmatpush1.msra.mxu0 0.0
        %524 = vmatprep.subr.mxu0 0.0
        %525 = vmatpush1.msra.mxu0 0.0
        %526 = vmatprep.subr.mxu0 0.0
        %527 = vmatpush1.msra.mxu0 0.0
        %528 = vmatprep.subr.mxu0 0.0
        %529 = vmatpush1.msra.mxu0 0.0
        %530 = vmatprep.subr.mxu0 0.0
        %531 = vmatpush1.msra.mxu0 0.0
        %532 = vmatprep.subr.mxu0 0.0
        %533 = vmatpush1.msra.mxu0 0.0
        %534 = vmatprep.subr.mxu0 0.0
        %535 = vmatpush1.msra.mxu0 0.0
        %536 = vmatprep.subr.mxu0 0.0
        %537 = vmatpush1.msra.mxu0 0.0
        %538 = vmatprep.subr.mxu0 0.0
        %539 = vmatpush1.msra.mxu0 0.0
        %540 = vmatprep.subr.mxu0 0.0
        %541 = vmatpush1.msra.mxu0 0.0
        %542 = vmatprep.subr.mxu0 0.0
        %543 = vmatpush1.msra.mxu0 0.0
        %544 = vmatprep.subr.mxu0 0.0
        %545 = vmatpush1.msra.mxu0 0.0
        %546 = vmatprep.subr.mxu0 0.0
        %547 = vmatpush1.msra.mxu0 0.0
        %548 = vmatprep.subr.mxu0 0.0
        %549 = vmatpush1.msra.mxu0 0.0
        %550 = vmatprep.subr.mxu0 %v499
        %551 = vmatpush1.msra.mxu0 %v498
        %552 = vmatprep.subr.mxu0 0.0
        %553 = vmatpush2.msra.mxu0 0.0
        %554 = vmatprep.subr.mxu0 0.0
        %555 = vmatpush2.msra.mxu0 0.0
        %556 = vmatprep.subr.mxu0 0.0
        %557 = vmatpush2.msra.mxu0 0.0
        %558 = vmatprep.subr.mxu0 0.0
        %559 = vmatpush2.msra.mxu0 0.0
        %560 = vmatprep.subr.mxu0 0.0
        %561 = vmatpush2.msra.mxu0 0.0
        %562 = vmatprep.subr.mxu0 0.0
        %563 = vmatpush2.msra.mxu0 0.0
        %564 = vmatprep.subr.mxu0 0.0
        %565 = vmatpush2.msra.mxu0 0.0
        %566 = vmatprep.subr.mxu0 0.0
        %567 = vmatpush2.msra.mxu0 0.0
        %568 = vmatprep.subr.mxu0 0.0
        %569 = vmatpush2.msra.mxu0 0.0
        %570 = vmatprep.subr.mxu0 0.0
        %571 = vmatpush2.msra.mxu0 0.0
        %572 = vmatprep.subr.mxu0 0.0
        %573 = vmatpush2.msra.mxu0 0.0
        %574 = vmatprep.subr.mxu0 0.0
        %575 = vmatpush2.msra.mxu0 0.0
        %576 = vmatprep.subr.mxu0 0.0
        %577 = vmatpush2.msra.mxu0 0.0
        %578 = vmatprep.subr.mxu0 0.0
        %579 = vmatpush2.msra.mxu0 0.0
        %580 = vmatprep.subr.mxu0 0.0
        %581 = vmatpush2.msra.mxu0 0.0
        %582 = vmatprep.subr.mxu0 0.0
        %583 = vmatpush2.msra.mxu0 0.0
        %584 = vmatprep.mubr.f32.mxu0 0.0
        %585 = vmatmul.mubr.f32.gmra.mxu0 %v515
        %v586 = vpop.f32.mrf.mxu0
        %v587 = vadd.f32 %v507, %v586
        %v588 = vpop.f32.mrf.mxu0
        %v589 = vadd.f32 %v507, %v588
        %590 = vmatprep.mubr.f32.mxu0 0.0
        %591 = vmatmul.mubr.f32.gmra.mxu0 %v518
        %v592 = vpop.f32.mrf.mxu0
        %v593 = vadd.f32 %v512, %v592
        %v594 = vpop.f32.mrf.mxu0
        %v595 = vadd.f32 %v512, %v594
        %596 = vdwg.mxu0
        %v597 = vmax.f32 %v587, 0.0
        %v598 = vmax.f32 %v589, 0.0
        %v599 = vmax.f32 %v593, 0.0
        %v600 = vmax.f32 %v595, 0.0
        %v601 = vld [vmem:[%s7] sm:$0xff]
        %v602 = vld [vmem:[%s7 + $0x8] sm:$0xff]
        %v603 = vld [vmem:[%s8] sm:$0xff]
        %v604 = vld [vmem:[%s8 + $0x8] sm:$0xff]
        %606 = vset.pattern.permute.xlu0 0
        %607 = vperm.xlu0 %606, %v603
        %v608 = vpop.permute.xlu0 %607
        %611 = vset.pattern.permute.xlu0 0
        %612 = vperm.xlu0 %611, %v604
        %v613 = vpop.permute.xlu0 %612
        %vm615 = vcmask 195584
        %v617 = vsel %vm615, %v601, 0
        %v620 = vsel %vm615, %v602, 0
        %622 = vmatprep.subr.mxu0 0.0
        %623 = vmatpush1.msra.mxu0 0.0
        %624 = vmatprep.subr.mxu0 0.0
        %625 = vmatpush1.msra.mxu0 0.0
        %626 = vmatprep.subr.mxu0 0.0
        %627 = vmatpush1.msra.mxu0 0.0
        %628 = vmatprep.subr.mxu0 0.0
        %629 = vmatpush1.msra.mxu0 0.0
        %630 = vmatprep.subr.mxu0 0.0
        %631 = vmatpush1.msra.mxu0 0.0
        %632 = vmatprep.subr.mxu0 0.0
        %633 = vmatpush1.msra.mxu0 0.0
        %634 = vmatprep.subr.mxu0 0.0
        %635 = vmatpush1.msra.mxu0 0.0
        %636 = vmatprep.subr.mxu0 0.0
        %637 = vmatpush1.msra.mxu0 0.0
        %638 = vmatprep.subr.mxu0 0.0
        %639 = vmatpush1.msra.mxu0 0.0
        %640 = vmatprep.subr.mxu0 0.0
        %641 = vmatpush1.msra.mxu0 0.0
        %642 = vmatprep.subr.mxu0 0.0
        %643 = vmatpush1.msra.mxu0 0.0
        %644 = vmatprep.subr.mxu0 0.0
        %645 = vmatpush1.msra.mxu0 0.0
        %646 = vmatprep.subr.mxu0 0.0
        %647 = vmatpush1.msra.mxu0 0.0
        %648 = vmatprep.subr.mxu0 %v600
        %649 = vmatpush1.msra.mxu0 %v599
        %650 = vmatprep.subr.mxu0 %v598
        %651 = vmatpush1.msra.mxu0 %v597
        %652 = vmatprep.subr.mxu0 %v499
        %653 = vmatpush1.msra.mxu0 %v498
        %654 = vmatprep.subr.mxu0 0.0
        %655 = vmatpush2.msra.mxu0 0.0
        %656 = vmatprep.subr.mxu0 0.0
        %657 = vmatpush2.msra.mxu0 0.0
        %658 = vmatprep.subr.mxu0 0.0
        %659 = vmatpush2.msra.mxu0 0.0
        %660 = vmatprep.subr.mxu0 0.0
        %661 = vmatpush2.msra.mxu0 0.0
        %662 = vmatprep.subr.mxu0 0.0
        %663 = vmatpush2.msra.mxu0 0.0
        %664 = vmatprep.subr.mxu0 0.0
        %665 = vmatpush2.msra.mxu0 0.0
        %666 = vmatprep.subr.mxu0 0.0
        %667 = vmatpush2.msra.mxu0 0.0
        %668 = vmatprep.subr.mxu0 0.0
        %669 = vmatpush2.msra.mxu0 0.0
        %670 = vmatprep.subr.mxu0 0.0
        %671 = vmatpush2.msra.mxu0 0.0
        %672 = vmatprep.subr.mxu0 0.0
        %673 = vmatpush2.msra.mxu0 0.0
        %674 = vmatprep.subr.mxu0 0.0
        %675 = vmatpush2.msra.mxu0 0.0
        %676 = vmatprep.subr.mxu0 0.0
        %677 = vmatpush2.msra.mxu0 0.0
        %678 = vmatprep.subr.mxu0 0.0
        %679 = vmatpush2.msra.mxu0 0.0
        %680 = vmatprep.subr.mxu0 0.0
        %681 = vmatpush2.msra.mxu0 0.0
        %682 = vmatprep.subr.mxu0 0.0
        %683 = vmatpush2.msra.mxu0 0.0
        %684 = vmatprep.subr.mxu0 0.0
        %685 = vmatpush2.msra.mxu0 0.0
        %686 = vmatprep.mubr.f32.mxu0 0.0
        %687 = vmatmul.mubr.f32.gmra.mxu0 %v617
        %v688 = vpop.f32.mrf.mxu0
        %v689 = vadd.f32 %v608, %v688
        %v690 = vpop.f32.mrf.mxu0
        %v691 = vadd.f32 %v608, %v690
        %692 = vmatprep.mubr.f32.mxu0 0.0
        %693 = vmatmul.mubr.f32.gmra.mxu0 %v620
        %v694 = vpop.f32.mrf.mxu0
        %v695 = vadd.f32 %v613, %v694
        %v696 = vpop.f32.mrf.mxu0
        %v697 = vadd.f32 %v613, %v696
        %698 = vdwg.mxu0
        %v699 = vmax.f32 %v689, 0.0
        %v700 = vmax.f32 %v691, 0.0
        %v701 = vmax.f32 %v695, 0.0
        %v702 = vmax.f32 %v697, 0.0
        %703 = vst [vmem:[%s322] sm:$0xff] %v699
        %704 = vst [vmem:[%s322 + $0x8] sm:$0xff] %v700
        %705 = vst [vmem:[%s322 + $0x10] sm:$0xff] %v701
        %706 = vst [vmem:[%s322 + $0x18] sm:$0xff] %v702
        %s707 = sand.u32 %s222, 1
        %s708 = sand.u32 %s222, 1
        %s709 = smul.addr %s708, 32
        %s710 = scalar_lea.vmem [#allocation2], %s709
        // Predicated region
        $region57: #{feature_proc_forward.1} parent=55 // pred_check
          %p711 = pneg %p232
        $region58: #{feature_proc_forward.1} parent=55 // pred_check_branch
          %713 = sbr.rel (%p711) target = $region60
        $region59: #{feature_proc_forward.1} parent=55 // pred_region
          %s714 = smul.u32 2, %s20
          %s715 = smul.addr %s714, 8
          %s716 = scalar_lea.vmem %s9, %s715
          // Predicated region
          $region61: #{feature_proc_forward.1} parent=59 // pred_check
            _
          $region62: #{feature_proc_forward.1} parent=59 // pred_check_branch
            %718 = sbr.rel (0) target = $region64
          $region63: #{feature_proc_forward.1} parent=59 // pred_region
            // Predicated region
            $region65: #{feature_proc_forward.1} parent=63 // pred_check
              _
            $region66: #{feature_proc_forward.1} parent=63 // pred_check_branch
              %720 = sbr.rel (0) target = $region68
            $region67: #{feature_proc_forward.1} parent=63 // pred_region
              loop: start=0, step=1, limit=1
              $region69: #{feature_proc_forward.1} parent=67 // loop_pre_header
                _
              $region70: #{feature_proc_forward.1} parent=67 // loop_header
                %s722 = sphi 0, %s726
                %p723 = scmp.ge.s32.totalorder %s722, 1
                %s727 = sphi %s710, %s710
                %s728 = sphi %s716, %s716
              $region71: #{feature_proc_forward.1} parent=67 // loop_header_branch
                %725 = sbr.rel (%p723) target = $region75
              $region72: #{feature_proc_forward.1} parent=67 // loop_body
                %v729 = vld [vmem:[%s727] sm:$0xff]
                %730 = vst [vmem:[%s728] sm:$0xff] %v729
                %v731 = vld [vmem:[%s727 + $0x8] sm:$0xff]
                %732 = vst [vmem:[%s728 + $0x8] sm:$0xff] %v731
                %v733 = vld [vmem:[%s727 + $0x10] sm:$0xff]
                %734 = vst [vmem:[%s728 + $0x20] sm:$0xff] %v733
                %v735 = vld [vmem:[%s727 + $0x18] sm:$0xff]
                %736 = vst [vmem:[%s728 + $0x28] sm:$0xff] %v735
              $region73: #{feature_proc_forward.1} parent=67 // loop_footer
                %s726 = sadd.s32 1, %s722
              $region74: #{feature_proc_forward.1} parent=67 // loop_footer_branch
                %721 = sbr.rel target = $region70
              $region75: #{feature_proc_forward.1} parent=67 // loop_exit
                _
            $region68: #{feature_proc_forward.1} parent=63 // pred_fallthru
              _
            // Predicated region
            $region76: #{feature_proc_forward.1} parent=63 // pred_check
              _
            $region77: #{feature_proc_forward.1} parent=63 // pred_check_branch
              %738 = sbr.rel target = $region79
            $region78: #{feature_proc_forward.1} parent=63 // pred_region
              _
            $region79: #{feature_proc_forward.1} parent=63 // pred_fallthru
              _
          $region64: #{feature_proc_forward.1} parent=59 // pred_fallthru
            _
          %739 = vnop
        $region60: #{feature_proc_forward.1} parent=55 // pred_fallthru
          _
      $region56: #{feature_proc_forward.1} parent=5 // pred_fallthru
        _
      %p740 = scmp.le.s32.totalorder 2, %s15
      // Predicated region
      $region80: #{feature_proc_forward.1} parent=5 // pred_check
        %p741 = pneg %p740
      $region81: #{feature_proc_forward.1} parent=5 // pred_check_branch
        %743 = sbr.rel (%p741) target = $region83
      $region82: #{feature_proc_forward.1} parent=5 // pred_region
        %s744 = ssub.s32 %s15, 2
        // Predicated region
        $region84: #{feature_proc_forward.1} parent=82 // pred_check
          %p745 = pneg %p238
        $region85: #{feature_proc_forward.1} parent=82 // pred_check_branch
          %747 = sbr.rel (%p745) target = $region87
        $region86: #{feature_proc_forward.1} parent=82 // pred_region
          %s748 = sand.u32 %s223, 1
          %s749 = sand.u32 %s223, 1
          %s750 = smul.addr %s749, 32
          %s751 = scalar_lea.vmem [#allocation2], %s750
        $region87: #{feature_proc_forward.1} parent=82 // pred_fallthru
          _
      $region83: #{feature_proc_forward.1} parent=5 // pred_fallthru
        _
    $region6: #{feature_proc_forward.1} parent=1 // loop_footer
      %s19 = sadd.s32 1, %s15
    $region7: #{feature_proc_forward.1} parent=1 // loop_footer_branch
      %14 = sbr.rel target = $region3
    $region8: #{feature_proc_forward.1} parent=1 // loop_exit
      _

</llo_original>
